<compile_context>
chip_gen: v7x
topology: tpu7x:2x2x1
jax: 0.10.0
libtpu: 0.0.40
codegen_flags: <defaults>
</compile_context>

<pallas_src>
import functools

import jax
import jax.numpy as jnp
from jax.experimental import pallas as pl
from jax.experimental.pallas import tpu as pltpu

_MIB = 1024 * 1024


def _layernorm_kernel(x_ref, a_ref, b_ref, o_ref, *, eps, feat, bf16_epilogue):
    # x_ref: (tm, F) tile of rows; a_ref/b_ref: (1, F) params broadcast per row.
    x = x_ref[...].astype(jnp.float32)
    mean = jnp.mean(x, axis=-1, keepdims=True)
    d = x - mean
    # torch.std default is unbiased (ddof=1): divide by (F - 1).
    # feat == 1 is degenerate (torch yields NaN); guard the div-by-zero.
    inv_n = jnp.float32(1.0 / (feat - 1)) if feat > 1 else jnp.float32(0.0)
    var = jnp.sum(d * d, axis=-1, keepdims=True) * inv_n
    # Exact per-row reciprocal on the (tm, 1) column instead of a full-tile
    # f32 divide on the VPU. approx=False keeps 1e-5 tolerance for f32 I/O.
    inv = pl.reciprocal(jnp.sqrt(var) + jnp.float32(eps), approx=False)
    if bf16_epilogue:
        # Stats above stay f32; the full-tile normalize/affine runs in bf16
        # (bf16 vregs pack [16,128] -> ~2x VALU throughput on v6e/v7x). Only
        # used when the output is bf16 anyway, so no output precision is lost.
        dh = d.astype(jnp.bfloat16)
        invh = inv.astype(jnp.bfloat16)
        ah = a_ref[...].astype(jnp.bfloat16)
        bh = b_ref[...].astype(jnp.bfloat16)
        o_ref[...] = ((dh * invh) * ah + bh).astype(o_ref.dtype)
    else:
        a = a_ref[...].astype(jnp.float32)
        b = b_ref[...].astype(jnp.float32)
        o_ref[...] = ((d * inv) * a + b).astype(o_ref.dtype)


def _tpu_generation_info():
    """Returns (physical_vmem_bytes_per_core, num_tensorcores, has_bf16_vpu)."""
    try:
        kind = jax.devices()[0].device_kind.lower()
    except Exception:
        kind = ""
    is_v7 = "v7" in kind
    try:
        physical = int(pltpu.get_tpu_info().vmem_capacity_bytes)
    except Exception:
        physical = 64 * _MIB if is_v7 else 128 * _MIB
    if is_v7:
        physical = min(physical, 64 * _MIB)  # 64 MiB per TensorCore on v7x
    # Cores the "parallel" grid axis is sharded over (v7x: 2 TCs; v4/v5p megacore).
    num_cores = 2 if (is_v7 or "v4" in kind or "v5p" in kind) else 1
    # v5e (and older) VPUs have no bf16 ALUs; only use the bf16 epilogue on
    # generations where it is known to help.
    has_bf16_vpu = ("v6" in kind) or is_v7
    return physical, num_cores, has_bf16_vpu


def _sublane_multiple(dtype):
    # f32 vreg tiles are [8,128]; sub-32-bit dtypes pack along sublanes:
    # bf16 -> 16, int8/fp8 -> 32.
    return max(8, 32 // max(1, jnp.dtype(dtype).itemsize))


def _choose_row_tile(rows, feat, itemsize, sublane, physical_vmem, num_cores):
    """Rows per tile: big enough to amortize per-step pipeline overhead, small
    enough that double-buffered in+out tiles (+ f32 intermediates) fit the
    generation's VMEM, and with enough tiles to feed every TensorCore."""
    # ~8 MiB tiles on 128 MiB parts (v5e/v6e), ~4 MiB on 64 MiB parts (v7x).
    tile_target = 8 * _MIB if physical_vmem >= 96 * _MIB else 4 * _MIB
    bytes_per_row = max(1, feat * itemsize)
    tm = max(sublane, (tile_target // bytes_per_row) // sublane * sublane)
    if num_cores > 1 and rows > sublane:
        # Keep >= 2 grid steps per TensorCore so the "parallel" axis feeds
        # both cores on v7x instead of leaving one idle.
        want = 2 * num_cores
        cap = max(sublane, (pl.cdiv(rows, want) // sublane) * sublane)
        tm = min(tm, cap)
    if tm >= rows:
        # Single full-extent block (legal even when rows % sublane != 0).
        return rows
    return tm


def layer_norm(x, a2, b2, eps=1e-6, *, row_tile=None):
    """x: (..., features). a2, b2: (features,). Returns same shape/dtype as x."""
    orig_shape = x.shape
    feat = orig_shape[-1]
    rows = 1
    for s in orig_shape[:-1]:
        rows *= s

    x2 = x.reshape(rows, feat)
    a2 = a2.reshape(1, feat)
    b2 = b2.reshape(1, feat)

    itemsize = jnp.dtype(x.dtype).itemsize
    sublane = _sublane_multiple(x.dtype)
    physical_vmem, num_cores, has_bf16_vpu = _tpu_generation_info()

    tm = row_tile if row_tile is not None else _choose_row_tile(
        rows, feat, itemsize, sublane, physical_vmem, num_cores)
    # No host-side pad/slice: Pallas handles the partial last block. Garbage
    # rows in that block are independent and their stores are masked.
    num_tiles = pl.cdiv(rows, tm)

    bf16_epilogue = has_bf16_vpu and x.dtype == jnp.bfloat16

    # Scoped-VMEM budget: double-buffered in+out tiles plus f32 intermediates,
    # clamped below the generation's physical VMEM (v7x has only 64 MiB/TC).
    tile_bytes = tm * feat * itemsize
    vmem_need = 4 * tile_bytes + 3 * tm * feat * 4 + 2 * _MIB
    vmem_cap = max(32 * _MIB, physical_vmem - 16 * _MIB)
    vmem_limit = int(min(vmem_cap, max(32 * _MIB, vmem_need)))

    kernel = functools.partial(_layernorm_kernel, eps=eps, feat=feat,
                               bf16_epilogue=bf16_epilogue)

    out = pl.pallas_call(
        kernel,
        out_shape=jax.ShapeDtypeStruct((rows, feat), x.dtype),
        grid_spec=pltpu.PrefetchScalarGridSpec(
            num_scalar_prefetch=0,
            grid=(num_tiles,),
            in_specs=[
                pl.BlockSpec((tm, feat), lambda i: (i, 0)),
                pl.BlockSpec((1, feat), lambda i: (0, 0)),
                pl.BlockSpec((1, feat), lambda i: (0, 0)),
            ],
            out_specs=pl.BlockSpec((tm, feat), lambda i: (i, 0)),
        ),
        compiler_params=pltpu.CompilerParams(
            dimension_semantics=("parallel",),
            vmem_limit_bytes=vmem_limit,
        ),
    )(x2, a2, b2)

    return out.reshape(orig_shape)


def _ref_layer_norm(x, a2, b2, eps):
    # Pure-JAX reference (unbiased std, eps added to std, matching the module).
    mean = jnp.mean(x, axis=-1, keepdims=True)
    std = jnp.std(x, axis=-1, keepdims=True, ddof=1)
    return a2 * (x - mean) / (std + eps) + b2


if __name__ == "__main__":
    key = jax.random.PRNGKey(0)
    batch, seq, hidden = 2, 8, 32

    x = jax.random.normal(key, (batch, seq, hidden), dtype=jnp.float32)
    # Deterministic parameter init matching nn.Parameter(torch.ones/zeros(features))
    a2 = jnp.ones((hidden,), dtype=jnp.float32)
    b2 = jnp.zeros((hidden,), dtype=jnp.float32)

    out = jax.block_until_ready(layer_norm(x, a2, b2, eps=1e-6))
    ref = _ref_layer_norm(x, a2, b2, 1e-6)
    assert jnp.allclose(out, ref, atol=1e-5, rtol=1e-5), "mismatch vs reference (f32)"

    # Partial-last-block path (rows % tile != 0), with a real affine.
    x3 = jax.random.normal(jax.random.PRNGKey(1), (3, 5, 256), dtype=jnp.float32)
    a3 = jax.random.normal(jax.random.PRNGKey(2), (256,), dtype=jnp.float32)
    b3 = jax.random.normal(jax.random.PRNGKey(3), (256,), dtype=jnp.float32)
    out3 = jax.block_until_ready(layer_norm(x3, a3, b3, eps=1e-6, row_tile=8))
    ref3 = _ref_layer_norm(x3, a3, b3, 1e-6)
    assert jnp.allclose(out3, ref3, atol=1e-4, rtol=1e-5), "mismatch vs reference (partial block)"

    # bf16 I/O smoke test (bf16 epilogue on v6e/v7x, f32 epilogue on v5e).
    xh = jax.random.normal(jax.random.PRNGKey(4), (4, 16, 256), dtype=jnp.float32)
    xh_bf16 = xh.astype(jnp.bfloat16)
    ah = jnp.ones((256,), dtype=jnp.float32)
    bh = jnp.zeros((256,), dtype=jnp.float32)
    outh = jax.block_until_ready(layer_norm(xh_bf16, ah, bh, eps=1e-6))
    refh = _ref_layer_norm(xh_bf16.astype(jnp.float32), ah, bh, 1e-6)
    assert jnp.allclose(outh.astype(jnp.float32), refh, atol=0.1, rtol=0.05), \
        "mismatch vs reference (bf16)"

    print("KERNEL_OK")
</pallas_src>

<mosaic_0001>
module attributes {stable_mosaic.version = 11 : i64} {
  func.func @_layernorm_kernel(%arg0: i32, %arg1: memref<16x32xf32, #tpu.memory_space<vmem>>, %arg2: memref<1x32xf32, #tpu.memory_space<vmem>>, %arg3: memref<1x32xf32, #tpu.memory_space<vmem>>, %arg4: memref<16x32xf32, #tpu.memory_space<vmem>>) attributes {dimension_semantics = [#tpu.dimension_semantics<parallel>], iteration_bounds = array<i64: 1>, scalar_prefetch = 0 : i64, scratch_operands = 0 : i64, tpu.core_type = #tpu.core_type<tc>, window_params = [{transform_indices = @transform_0, window_bounds = array<i64: 16, 32>}, {pipeline_mode = #tpu.pipeline_mode<synchronous>, transform_indices = @transform_1, window_bounds = array<i64: 1, 32>}, {pipeline_mode = #tpu.pipeline_mode<synchronous>, transform_indices = @transform_2, window_bounds = array<i64: 1, 32>}, {transform_indices = @transform_3, window_bounds = array<i64: 16, 32>}]} {
    %c0 = arith.constant 0 : index
    %c0_0 = arith.constant 0 : index
    %0 = vector.load %arg1[%c0, %c0_0] : memref<16x32xf32, #tpu.memory_space<vmem>>, vector<16x32xf32>
    %cst = arith.constant dense<0.000000e+00> : vector<16xf32>
    %1 = vector.multi_reduction <add>, %0, %cst [1] : vector<16x32xf32> to vector<16xf32>
    %2 = vector.shape_cast %1 : vector<16xf32> to vector<16x1xf32>
    %cst_1 = arith.constant 3.200000e+01 : f32
    %3 = vector.broadcast %cst_1 : f32 to vector<16x1xf32>
    %4 = arith.divf %2, %3 : vector<16x1xf32>
    %5 = vector.broadcast %4 : vector<16x1xf32> to vector<16x32xf32>
    %6 = arith.subf %0, %5 : vector<16x32xf32>
    %7 = arith.mulf %6, %6 : vector<16x32xf32>
    %cst_2 = arith.constant dense<0.000000e+00> : vector<16xf32>
    %8 = vector.multi_reduction <add>, %7, %cst_2 [1] : vector<16x32xf32> to vector<16xf32>
    %9 = vector.shape_cast %8 : vector<16xf32> to vector<16x1xf32>
    %cst_3 = arith.constant 0.0322580636 : f32
    %10 = vector.broadcast %cst_3 : f32 to vector<16x1xf32>
    %11 = arith.mulf %9, %10 : vector<16x1xf32>
    %12 = math.sqrt %11 : vector<16x1xf32>
    %cst_4 = arith.constant 9.99999997E-7 : f32
    %13 = vector.broadcast %cst_4 : f32 to vector<16x1xf32>
    %14 = arith.addf %12, %13 : vector<16x1xf32>
    %15 = tpu.reciprocal %14 : vector<16x1xf32> -> vector<16x1xf32>
    %c0_5 = arith.constant 0 : index
    %c0_6 = arith.constant 0 : index
    %16 = vector.load %arg2[%c0_5, %c0_6] : memref<1x32xf32, #tpu.memory_space<vmem>>, vector<1x32xf32>
    %c0_7 = arith.constant 0 : index
    %c0_8 = arith.constant 0 : index
    %17 = vector.load %arg3[%c0_7, %c0_8] : memref<1x32xf32, #tpu.memory_space<vmem>>, vector<1x32xf32>
    %18 = vector.broadcast %15 : vector<16x1xf32> to vector<16x32xf32>
    %19 = arith.mulf %6, %18 : vector<16x32xf32>
    %20 = vector.broadcast %16 : vector<1x32xf32> to vector<16x32xf32>
    %21 = arith.mulf %19, %20 : vector<16x32xf32>
    %22 = vector.broadcast %17 : vector<1x32xf32> to vector<16x32xf32>
    %23 = arith.addf %21, %22 : vector<16x32xf32>
    %c0_9 = arith.constant 0 : index
    %c0_10 = arith.constant 0 : index
    %24 = vector.load %arg4[%c0_9, %c0_10] : memref<16x32xf32, #tpu.memory_space<vmem>>, vector<16x32xf32>
    tpu.vector_store %arg4[%c0_9, %c0_10], %23 {strides = array<i32>} : memref<16x32xf32, #tpu.memory_space<vmem>>, vector<16x32xf32>,
    return
  }
  func.func @transform_0(%arg0: i32) -> (i32, i32) {
    %c0_i32 = arith.constant 0 : i32
    %c0_i32_0 = arith.constant 0 : i32
    return %arg0, %c0_i32 : i32, i32
  }
  func.func @transform_1(%arg0: i32) -> (i32, i32) {
    %c0_i32 = arith.constant 0 : i32
    %c0_i32_0 = arith.constant 0 : i32
    %c0_i32_1 = arith.constant 0 : i32
    return %c0_i32, %c0_i32_0 : i32, i32
  }
  func.func @transform_2(%arg0: i32) -> (i32, i32) {
    %c0_i32 = arith.constant 0 : i32
    %c0_i32_0 = arith.constant 0 : i32
    %c0_i32_1 = arith.constant 0 : i32
    return %c0_i32, %c0_i32_0 : i32, i32
  }
  func.func @transform_3(%arg0: i32) -> (i32, i32) {
    %c0_i32 = arith.constant 0 : i32
    %c0_i32_0 = arith.constant 0 : i32
    return %arg0, %c0_i32 : i32, i32
  }
}

</mosaic_0001>

<llo_original>
// kernel: tpu_custom_call.1
$region0: #{tpu_custom_call.1}
  #allocation0 [shape = 'u32[]', space=smem, size = 0x4, offset = 0x4, fixed_abs, tag = 'smem constant byte address 0x4 - core index']
  #allocation1 [shape = 'u32[144,128]{1,0:T(1,128)}', space=vmem, size = 0x12000, scoped, tag = 'internal scratch']
  %s0 = inlined_call_operand.hbm [shape: f32[16,32], index: 0, kind: input, shape index: {}]
  %s1 = inlined_call_operand.vmem [shape: f32[1,32], index: 1, kind: input, shape index: {}]
  %s2 = inlined_call_operand.vmem [shape: f32[1,32], index: 2, kind: input, shape index: {}]
  %s3 = inlined_call_operand.hbm [shape: f32[16,32], index: 3, kind: output, shape index: {}]
  %s4 = sld [smem:[#allocation0]]
  $region26: #{tpu_custom_call.1} parent=0
    _
  %s6 = ssub.s32 1, %s4
  %s7 = scalar_select 0, %s6, %s4
  $region1: #{tpu_custom_call.1} parent=0
    #allocation2 [shape = 'u8[8192]{0}', space=vmem, size = 0x2000, scoped, tag = 'input window, operand 0, single buffered']
    #allocation3 [shape = 's32[1]{0}', space=sflag, size = 0x4, scoped, tag = 'scoped memory for tpu_custom_call.1']
    #allocation4 [shape = 's32[1]{0}', space=sflag, size = 0x4, scoped, tag = 'scoped memory for tpu_custom_call.1']
    #allocation5 [shape = 'u8[8192]{0}', space=vmem, size = 0x2000, scoped, tag = 'output window, operand 0, single buffered']
    %8 = vsyncpa [#allocation3], 0
    %9 = vsyncpa [#allocation4], 0
    // Predicated region
    $region2: #{tpu_custom_call.1} parent=1 // pred_check
      _
    $region3: #{tpu_custom_call.1} parent=1 // pred_check_branch
      %11 = sbr.rel (0) target = $region5
    $region4: #{tpu_custom_call.1} parent=1 // pred_region
      %s13 = ssub.s32 256, 256
      %14 = vsyncadd [#allocation3], %s13
      %s15 = sshll.u32 [#allocation2], 4
      %s16 = int_to_ptr.vmem [resolvable:$true] %s15
      %21 = dma.hbm_to_vmem [thread:$0]  %s0, 256, %s16, [#allocation3], 128, 128, 8
    $region5: #{tpu_custom_call.1} parent=1 // pred_fallthru
      _
    // Predicated region
    $region6: #{tpu_custom_call.1} parent=1 // pred_check
      _
    $region7: #{tpu_custom_call.1} parent=1 // pred_check_branch
      %23 = sbr.rel (0) target = $region9
    $region8: #{tpu_custom_call.1} parent=1 // pred_region
      _
    $region9: #{tpu_custom_call.1} parent=1 // pred_fallthru
      _
    // Predicated region
    $region10: #{tpu_custom_call.1} parent=1 // pred_check
      _
    $region11: #{tpu_custom_call.1} parent=1 // pred_check_branch
      %25 = sbr.rel (0) target = $region13
    $region12: #{tpu_custom_call.1} parent=1 // pred_region
      _
    $region13: #{tpu_custom_call.1} parent=1 // pred_fallthru
      _
    // Predicated region
    $region14: #{tpu_custom_call.1} parent=1 // pred_check
      _
    $region15: #{tpu_custom_call.1} parent=1 // pred_check_branch
      %27 = sbr.rel (0) target = $region17
    $region16: #{tpu_custom_call.1} parent=1 // pred_region
      %28 = dma.done [#allocation3], 256
    $region17: #{tpu_custom_call.1} parent=1 // pred_fallthru
      _
    %v29 = vld [vmem:[#allocation2] sm:$0xff]
    %v30 = vld [vmem:[#allocation2 + $0x8] sm:$0xff]
    %vm31 = vcmask 261120
    %v32 = vsel %vm31, %v29, 0.0
    %33 = vadd.xlane.f32.xlu0 %v32
    %v34 = vpop.xlane.xlu0 %33
    %v35 = vsel %vm31, %v30, 0.0
    %36 = vadd.xlane.f32.xlu0 %v35
    %v37 = vpop.xlane.xlu0 %36
    %v38 = vrcp.pop 32.0
    %v39 = vmul.f32 %v34, %v38
    %v40 = vmul.f32 %v37, %v38
    %v41 = vsub.f32 %v29, %v39
    %v42 = vsub.f32 %v30, %v40
    %v43 = vmul.f32 %v41, %v41
    %v44 = vmul.f32 %v42, %v42
    %v45 = vsel %vm31, %v43, 0.0
    %46 = vadd.xlane.f32.xlu0 %v45
    %v47 = vpop.xlane.xlu0 %46
    %v48 = vsel %vm31, %v44, 0.0
    %49 = vadd.xlane.f32.xlu0 %v48
    %v50 = vpop.xlane.xlu0 %49
    %v51 = vmul.f32 %v47, 0.032258064
    %v52 = vmul.f32 %v50, 0.032258064
    %v53 = vrsqrt.pop %v51
    %v54 = vmul.f32 %v51, %v53
    %vm55 = vcmp.eq.f32.partialorder %v51, inf
    %v56 = vsel %vm55, %v51, %v54
    %vm57 = vcmp.eq.f32.partialorder %v51, 0.0
    %v58 = vand.u32 %v51, 2147483648
    %v59 = vsel %vm57, %v58, %v56
    %v60 = vrsqrt.pop %v52
    %v61 = vmul.f32 %v52, %v60
    %vm62 = vcmp.eq.f32.partialorder %v52, inf
    %v63 = vsel %vm62, %v52, %v61
    %vm64 = vcmp.eq.f32.partialorder %v52, 0.0
    %v65 = vand.u32 %v52, 2147483648
    %v66 = vsel %vm64, %v65, %v63
    %v67 = vadd.f32 %v59, 1e-06
    %v68 = vadd.f32 %v66, 1e-06
    %v69 = vrcp.pop %v67
    %v70 = vrcp.pop %v68
    %v71 = vld [vmem:[%s1] sm:$0x1]
    %v72 = vld [vmem:[%s2] sm:$0x1]
    %v73 = vmul.f32 %v41, %v69
    %v74 = vmul.f32 %v42, %v70
    %v76 = vlaneseq
    %v77 = vshrl.u32 %v76, 7
    %v78 = vsub.s32 0, %v77
    %v79 = vrot.slane %v71, %v78
    %v81 = vmul.f32 %v73, %v79
    %v82 = vmul.f32 %v74, %v79
    %v84 = vlaneseq
    %v85 = vshrl.u32 %v84, 7
    %v86 = vsub.s32 0, %v85
    %v87 = vrot.slane %v72, %v86
    %v89 = vadd.f32 %v81, %v87
    %v90 = vadd.f32 %v82, %v87
    %91 = vst.msk [vmem:[#allocation5] sm:$0xff] %vm31, %v89
    %92 = vst.msk [vmem:[#allocation5 + $0x8] sm:$0xff] %vm31, %v90
    // Predicated region
    $region18: #{tpu_custom_call.1} parent=1 // pred_check
      _
    $region19: #{tpu_custom_call.1} parent=1 // pred_check_branch
      %94 = sbr.rel (0) target = $region21
    $region20: #{tpu_custom_call.1} parent=1 // pred_region
      %s96 = ssub.s32 256, 256
      %97 = vsyncadd [#allocation4], %s96
      %s98 = sshll.u32 [#allocation5], 4
      %s99 = int_to_ptr.vmem [resolvable:$true] %s98
      %104 = dma.vmem_to_hbm [thread:$0]  %s99, 256, %s3, [#allocation4], 128, 128, 8
    $region21: #{tpu_custom_call.1} parent=1 // pred_fallthru
      _
    // Predicated region
    $region22: #{tpu_custom_call.1} parent=1 // pred_check
      _
    $region23: #{tpu_custom_call.1} parent=1 // pred_check_branch
      %106 = sbr.rel (0) target = $region25
    $region24: #{tpu_custom_call.1} parent=1 // pred_region
      %107 = dma.done [#allocation4], 256
    $region25: #{tpu_custom_call.1} parent=1 // pred_fallthru
      _
    %108 = vsyncpa [#allocation3], 1
    %109 = vsyncpa [#allocation4], 1

</llo_original>
